<compile_context>
chip_gen: v5e
topology: v5e:2x2
jax: 0.10.0
libtpu: 0.0.40
codegen_flags: <defaults>
</compile_context>

<pallas_src>
import functools

import jax
import jax.numpy as jnp
from jax import lax
from jax.experimental import pallas as pl
from jax.experimental.pallas import tpu as pltpu

EPS = 1e-5  # torch.nn.functional.layer_norm default eps


# ----------------------------------------------------------------------- kernels
def _layernorm_kernel(x_ref, gamma_ref, beta_ref, o_ref):
    """Main path: rows on sublanes, normalized dim on lanes. gamma/beta are (1, D) f32."""
    x = x_ref[...].astype(jnp.float32)
    inv_dim = jnp.float32(1.0 / x_ref.shape[-1])       # static constant
    mean = jnp.sum(x, axis=-1, keepdims=True) * inv_dim  # XLU reduce
    c = x - mean
    var = jnp.sum(c * c, axis=-1, keepdims=True) * inv_dim  # two-pass variance
    inv = lax.rsqrt(var + EPS)                            # EUP slot
    y = c * inv * gamma_ref[...] + beta_ref[...]
    o_ref[...] = y.astype(o_ref.dtype)


def _layernorm_packed_kernel(x_ref, gamma_ref, beta_ref, seg_ref, o_ref, *, inv_dim):
    """Small-D path: `pack` logical rows packed along the 128-lane axis.

    seg_ref is a (P*D, P*D) block-diagonal ones matrix; x @ seg broadcasts each
    segment's sum to every lane of that segment (segmented reduce on the MXU),
    keeping loads/stores lane-dense for dims << 128.
    """
    x = x_ref[...].astype(jnp.float32)
    seg = seg_ref[...]
    scale = jnp.float32(inv_dim)
    mean = jnp.dot(x, seg, preferred_element_type=jnp.float32) * scale
    c = x - mean
    var = jnp.dot(c * c, seg, preferred_element_type=jnp.float32) * scale
    inv = lax.rsqrt(var + EPS)
    y = c * inv * gamma_ref[...] + beta_ref[...]
    o_ref[...] = y.astype(o_ref.dtype)


# ----------------------------------------------------------------------- helpers
def _round_up(a: int, b: int) -> int:
    return (a + b - 1) // b * b


def _pick_tile_rows(n_rows: int, row_bytes: int, row_align: int,
                    *, target_bytes: int = 2 << 20, max_rows: int = 1024,
                    min_steps: int = 8) -> int:
    """Sublane-aligned row tile of ~target_bytes of input, >= min_steps grid steps
    when possible, preferring an even split of n_rows."""
    if n_rows <= row_align:
        return n_rows  # single block equal to the full array extent
    # ~target_bytes of input per step (HBM-bound: 512-1024 rows already reach ~85%
    # of roofline; bigger tiles only cost VMEM and pipeline overlap).
    tile = max(row_align, (target_bytes // max(row_bytes, 1)) // row_align * row_align)
    tile = min(tile, max_rows)
    # Never exceed the largest aligned tile that fits inside the array.
    tile = min(tile, (n_rows // row_align) * row_align)
    # Keep >= min_steps grid steps (>= min_steps/2 per TensorCore on v7x megacore).
    if n_rows > min_steps * row_align:
        tile = min(tile, _round_up(pl.cdiv(n_rows, min_steps), row_align))
    tile = max(tile, row_align)
    # Prefer a divisor of n_rows near the target: uniform DMA sizes, no ragged
    # masked last block.
    lo = max(row_align, (tile // 2 // row_align) * row_align)
    for cand in range(tile, lo - 1, -row_align):
        if n_rows % cand == 0:
            return cand
    return tile


def _vmem_limit_bytes() -> int:
    try:
        vmem_cap = int(pltpu.get_tpu_info().vmem_capacity_bytes)
    except Exception:
        vmem_cap = 64 << 20  # conservative fallback (v7x physical VMEM per TC)
    # Small tiles => defaults are nearly enough; keep a modest explicit limit
    # (48 MiB on v5e/v6e, 32 MiB on v7x) as headroom for the f32 intermediates.
    return min(vmem_cap // 2, 48 << 20)


# ----------------------------------------------------------------------- wrappers
def _layer_norm_rows(x2, gamma32, beta32, out_dtype, row_align, vmem_limit):
    n_rows, dim = x2.shape
    itemsize = jnp.dtype(x2.dtype).itemsize
    tile_rows = _pick_tile_rows(n_rows, dim * itemsize, row_align)
    grid = (pl.cdiv(n_rows, tile_rows),)
    return pl.pallas_call(
        _layernorm_kernel,
        out_shape=jax.ShapeDtypeStruct((n_rows, dim), out_dtype),
        grid_spec=pltpu.PrefetchScalarGridSpec(
            num_scalar_prefetch=0,
            grid=grid,
            in_specs=[
                pl.BlockSpec((tile_rows, dim), lambda i: (i, 0)),
                pl.BlockSpec((1, dim), lambda i: (0, 0)),
                pl.BlockSpec((1, dim), lambda i: (0, 0)),
            ],
            out_specs=pl.BlockSpec((tile_rows, dim), lambda i: (i, 0)),
        ),
        compiler_params=pltpu.CompilerParams(
            dimension_semantics=("parallel",),
            vmem_limit_bytes=vmem_limit,
        ),
    )(x2, gamma32, beta32)


def _layer_norm_small_dim(x2, gamma32, beta32, out_dtype, row_align, vmem_limit, pack):
    n_rows, dim = x2.shape
    packed_dim = pack * dim
    itemsize = jnp.dtype(x2.dtype).itemsize

    # Pad rows so the packed row count is sublane-aligned.  Padded zero rows are
    # normalized independently and sliced off below; they never touch valid rows.
    n_rows_pad = _round_up(n_rows, pack * row_align)
    if n_rows_pad != n_rows:
        x2 = jnp.pad(x2, ((0, n_rows_pad - n_rows), (0, 0)))
    rp = n_rows_pad // pack
    xp = x2.reshape(rp, packed_dim)  # free row-major reshape

    # Block-diagonal ones matrix: (x @ seg) broadcasts each segment's sum across that
    # segment's lanes — a segmented reduce on the otherwise-idle MXU.
    seg_ids = jnp.arange(packed_dim, dtype=jnp.int32) // dim
    seg = (seg_ids[:, None] == seg_ids[None, :]).astype(jnp.float32)

    gamma_t = jnp.tile(gamma32, (1, pack))
    beta_t = jnp.tile(beta32, (1, pack))

    tile_rows = _pick_tile_rows(rp, packed_dim * itemsize, row_align)
    grid = (pl.cdiv(rp, tile_rows),)

    out = pl.pallas_call(
        functools.partial(_layernorm_packed_kernel, inv_dim=1.0 / dim),
        out_shape=jax.ShapeDtypeStruct((rp, packed_dim), out_dtype),
        grid_spec=pltpu.PrefetchScalarGridSpec(
            num_scalar_prefetch=0,
            grid=grid,
            in_specs=[
                pl.BlockSpec((tile_rows, packed_dim), lambda i: (i, 0)),
                pl.BlockSpec((1, packed_dim), lambda i: (0, 0)),
                pl.BlockSpec((1, packed_dim), lambda i: (0, 0)),
                pl.BlockSpec((packed_dim, packed_dim), lambda i: (0, 0)),
            ],
            out_specs=pl.BlockSpec((tile_rows, packed_dim), lambda i: (i, 0)),
        ),
        compiler_params=pltpu.CompilerParams(
            dimension_semantics=("parallel",),
            vmem_limit_bytes=vmem_limit,
        ),
    )(xp, gamma_t, beta_t, seg)

    out = out.reshape(n_rows_pad, dim)
    if n_rows_pad != n_rows:
        out = out[:n_rows]
    return out


def layer_norm(x: jax.Array, gamma: jax.Array, beta: jax.Array) -> jax.Array:
    """LayerNorm over the last axis of x (any leading shape), matching
    torch.nn.functional.layer_norm(x, x.shape[-1:], gamma, beta)."""
    orig_shape = x.shape
    dim = orig_shape[-1]
    assert gamma.shape == (dim,) and beta.shape == (dim,)

    x2 = x.reshape(-1, dim)  # row-major collapse of leading dims (free)
    out_dtype = x.dtype
    itemsize = jnp.dtype(x.dtype).itemsize
    # Sublane alignment for packed dtypes: f32 -> 8, bf16 -> 16, int8/fp8 -> 32.
    row_align = {4: 8, 2: 16, 1: 32}.get(itemsize, 8)
    vmem_limit = _vmem_limit_bytes()

    # Pre-cast params once in the wrapper; kernels use them directly (no per-step cast).
    gamma32 = gamma.astype(jnp.float32).reshape(1, dim)
    beta32 = beta.astype(jnp.float32).reshape(1, dim)

    pack = 128 // dim if dim < 128 else 1
    if pack >= 2:
        out2 = _layer_norm_small_dim(x2, gamma32, beta32, out_dtype, row_align,
                                     vmem_limit, pack)
    else:
        out2 = _layer_norm_rows(x2, gamma32, beta32, out_dtype, row_align, vmem_limit)
    return out2.reshape(orig_shape)


if __name__ == "__main__":
    def _ref(x, gamma, beta):
        mean = jnp.mean(x, axis=-1, keepdims=True)
        var = jnp.mean((x - mean) ** 2, axis=-1, keepdims=True)
        return (x - mean) / jnp.sqrt(var + EPS) * gamma + beta

    # Module __init__(dim): gamma = ones(dim) (Parameter), beta = zeros(dim) (buffer).
    batch, seq, hidden = 2, 8, 32
    x = jax.random.normal(jax.random.PRNGKey(0), (batch, seq, hidden), dtype=jnp.float32)
    gamma = jnp.ones((hidden,), dtype=jnp.float32)
    beta = jnp.zeros((hidden,), dtype=jnp.float32)

    y = jax.block_until_ready(layer_norm(x, gamma, beta))
    assert jnp.allclose(y, _ref(x, gamma, beta), atol=2e-5, rtol=2e-5), \
        "mismatch vs reference (small-dim packed path)"

    # Also exercise the lane-dense main path (dim >= 128).
    hidden2 = 256
    xb = jax.random.normal(jax.random.PRNGKey(1), (batch, seq, hidden2), dtype=jnp.float32)
    gammab = jnp.ones((hidden2,), dtype=jnp.float32)
    betab = jnp.zeros((hidden2,), dtype=jnp.float32)
    yb = jax.block_until_ready(layer_norm(xb, gammab, betab))
    assert jnp.allclose(yb, _ref(xb, gammab, betab), atol=2e-5, rtol=2e-5), \
        "mismatch vs reference (main path)"

    print("KERNEL_OK")
</pallas_src>

<mosaic_0001>
module attributes {stable_mosaic.version = 11 : i64} {
  func.func @_layernorm_packed_kernel(%arg0: i32, %arg1: memref<8x128xf32, #tpu.memory_space<vmem>>, %arg2: memref<1x128xf32, #tpu.memory_space<vmem>>, %arg3: memref<1x128xf32, #tpu.memory_space<vmem>>, %arg4: memref<128x128xf32, #tpu.memory_space<vmem>>, %arg5: memref<8x128xf32, #tpu.memory_space<vmem>>) attributes {dimension_semantics = [#tpu.dimension_semantics<parallel>], iteration_bounds = array<i64: 1>, scalar_prefetch = 0 : i64, scratch_operands = 0 : i64, tpu.core_type = #tpu.core_type<tc>, window_params = [{transform_indices = @transform_0, window_bounds = array<i64: 8, 128>}, {pipeline_mode = #tpu.pipeline_mode<synchronous>, transform_indices = @transform_1, window_bounds = array<i64: 1, 128>}, {pipeline_mode = #tpu.pipeline_mode<synchronous>, transform_indices = @transform_2, window_bounds = array<i64: 1, 128>}, {pipeline_mode = #tpu.pipeline_mode<synchronous>, transform_indices = @transform_3, window_bounds = array<i64: 128, 128>}, {transform_indices = @transform_4, window_bounds = array<i64: 8, 128>}]} {
    %c0 = arith.constant 0 : index
    %c0_0 = arith.constant 0 : index
    %0 = vector.load %arg1[%c0, %c0_0] : memref<8x128xf32, #tpu.memory_space<vmem>>, vector<8x128xf32>
    %c0_1 = arith.constant 0 : index
    %c0_2 = arith.constant 0 : index
    %1 = vector.load %arg4[%c0_1, %c0_2] : memref<128x128xf32, #tpu.memory_space<vmem>>, vector<128x128xf32>
    %cst = arith.constant dense<0.000000e+00> : vector<8x128xf32>
    %2 = tpu.matmul %0, %1, %cst {dimension_numbers = #tpu.dot_dimension_numbers<[1], [0], [0], [1], [0, 0, 1, 1], [], []>} : vector<8x128xf32>, vector<128x128xf32>, vector<8x128xf32> -> vector<8x128xf32>
    %cst_3 = arith.constant 3.125000e-02 : f32
    %3 = vector.broadcast %cst_3 : f32 to vector<8x128xf32>
    %4 = arith.mulf %2, %3 : vector<8x128xf32>
    %5 = arith.subf %0, %4 : vector<8x128xf32>
    %6 = arith.mulf %5, %5 : vector<8x128xf32>
    %cst_4 = arith.constant dense<0.000000e+00> : vector<8x128xf32>
    %7 = tpu.matmul %6, %1, %cst_4 {dimension_numbers = #tpu.dot_dimension_numbers<[1], [0], [0], [1], [0, 0, 1, 1], [], []>} : vector<8x128xf32>, vector<128x128xf32>, vector<8x128xf32> -> vector<8x128xf32>
    %cst_5 = arith.constant 3.125000e-02 : f32
    %8 = vector.broadcast %cst_5 : f32 to vector<8x128xf32>
    %9 = arith.mulf %7, %8 : vector<8x128xf32>
    %cst_6 = arith.constant 9.99999974E-6 : f32
    %10 = vector.broadcast %cst_6 : f32 to vector<8x128xf32>
    %11 = arith.addf %9, %10 : vector<8x128xf32>
    %12 = math.rsqrt %11 : vector<8x128xf32>
    %13 = arith.mulf %5, %12 : vector<8x128xf32>
    %c0_7 = arith.constant 0 : index
    %c0_8 = arith.constant 0 : index
    %14 = vector.load %arg2[%c0_7, %c0_8] : memref<1x128xf32, #tpu.memory_space<vmem>>, vector<1x128xf32>
    %15 = vector.broadcast %14 : vector<1x128xf32> to vector<8x128xf32>
    %16 = arith.mulf %13, %15 : vector<8x128xf32>
    %c0_9 = arith.constant 0 : index
    %c0_10 = arith.constant 0 : index
    %17 = vector.load %arg3[%c0_9, %c0_10] : memref<1x128xf32, #tpu.memory_space<vmem>>, vector<1x128xf32>
    %18 = vector.broadcast %17 : vector<1x128xf32> to vector<8x128xf32>
    %19 = arith.addf %16, %18 : vector<8x128xf32>
    %c0_11 = arith.constant 0 : index
    %c0_12 = arith.constant 0 : index
    %20 = vector.load %arg5[%c0_11, %c0_12] : memref<8x128xf32, #tpu.memory_space<vmem>>, vector<8x128xf32>
    tpu.vector_store %arg5[%c0_11, %c0_12], %19 {strides = array<i32>} : memref<8x128xf32, #tpu.memory_space<vmem>>, vector<8x128xf32>,
    return
  }
  func.func @transform_0(%arg0: i32) -> (i32, i32) {
    %c0_i32 = arith.constant 0 : i32
    %c0_i32_0 = arith.constant 0 : i32
    return %arg0, %c0_i32 : i32, i32
  }
  func.func @transform_1(%arg0: i32) -> (i32, i32) {
    %c0_i32 = arith.constant 0 : i32
    %c0_i32_0 = arith.constant 0 : i32
    %c0_i32_1 = arith.constant 0 : i32
    return %c0_i32, %c0_i32_0 : i32, i32
  }
  func.func @transform_2(%arg0: i32) -> (i32, i32) {
    %c0_i32 = arith.constant 0 : i32
    %c0_i32_0 = arith.constant 0 : i32
    %c0_i32_1 = arith.constant 0 : i32
    return %c0_i32, %c0_i32_0 : i32, i32
  }
  func.func @transform_3(%arg0: i32) -> (i32, i32) {
    %c0_i32 = arith.constant 0 : i32
    %c0_i32_0 = arith.constant 0 : i32
    %c0_i32_1 = arith.constant 0 : i32
    return %c0_i32, %c0_i32_0 : i32, i32
  }
  func.func @transform_4(%arg0: i32) -> (i32, i32) {
    %c0_i32 = arith.constant 0 : i32
    %c0_i32_0 = arith.constant 0 : i32
    return %arg0, %c0_i32 : i32, i32
  }
}

</mosaic_0001>

<llo_original>
// kernel: tpu_custom_call.1
$region0: #{tpu_custom_call.1}
  #allocation0 [shape = 'u32[]', space=smem, size = 0x4, offset = 0x4, fixed_abs, tag = 'smem constant byte address 0x4 - core index']
  #allocation1 [shape = 'u32[72,128]{1,0:T(1,128)}', space=vmem, size = 0x9000, scoped, tag = 'internal scratch']
  %s0 = inlined_call_operand.hbm [shape: f32[8,128], index: 0, kind: input, shape index: {}]
  %s1 = inlined_call_operand.hbm [shape: f32[1,128], index: 1, kind: input, shape index: {}]
  %s2 = inlined_call_operand.vmem [shape: f32[1,128], index: 2, kind: input, shape index: {}]
  %s3 = inlined_call_operand.hbm [shape: f32[128,128], index: 3, kind: input, shape index: {}]
  %s4 = inlined_call_operand.hbm [shape: f32[8,128], index: 4, kind: output, shape index: {}]
  %s5 = sld [smem:[#allocation0]]
  $region38: #{tpu_custom_call.1} parent=0
    _
  %s7 = ssub.s32 1, %s5
  %s8 = scalar_select 0, %s7, %s5
  $region1: #{tpu_custom_call.1} parent=0
    #allocation2 [shape = 'u8[4096]{0}', space=vmem, size = 0x1000, scoped, tag = 'input window, operand 0, single buffered']
    #allocation3 [shape = 's32[1]{0}', space=sflag, size = 0x4, scoped, tag = 'scoped memory for tpu_custom_call.1']
    #allocation4 [shape = 's32[1]{0}', space=sflag, size = 0x4, scoped, tag = 'scoped memory for tpu_custom_call.1']
    #allocation5 [shape = 'u8[512]{0}', space=vmem, size = 0x400, scoped, tag = 'input window, operand 1, single buffered']
    #allocation6 [shape = 's32[1]{0}', space=sflag, size = 0x4, scoped, tag = 'scoped memory for tpu_custom_call.1']
    #allocation7 [shape = 'u8[65536]{0}', space=vmem, size = 0x10000, scoped, tag = 'input window, operand 3, single buffered']
    #allocation8 [shape = 'u8[4096]{0}', space=vmem, size = 0x1000, scoped, tag = 'output window, operand 0, single buffered']
    %9 = vsyncpa [#allocation3], 0
    %10 = vsyncpa [#allocation6], 0
    %11 = vsyncpa [#allocation4], 0
    // Predicated region
    $region2: #{tpu_custom_call.1} parent=1 // pred_check
      _
    $region3: #{tpu_custom_call.1} parent=1 // pred_check_branch
      %13 = sbr.rel (0) target = $region5
    $region4: #{tpu_custom_call.1} parent=1 // pred_region
      %15 = vsyncadd [#allocation3], 0
      %s17 = sshll.u32 %s0, 4
      %s18 = int_to_ptr.hbm [resolvable:$true] %s17
      %s19 = sshll.u32 [#allocation2], 4
      %s20 = int_to_ptr.vmem [resolvable:$true] %s19
      %22 = dma.hbm_to_vmem [thread:$0]  %s18, 128, %s20, [#allocation3]
    $region5: #{tpu_custom_call.1} parent=1 // pred_fallthru
      _
    // Predicated region
    $region6: #{tpu_custom_call.1} parent=1 // pred_check
      _
    $region7: #{tpu_custom_call.1} parent=1 // pred_check_branch
      %24 = sbr.rel (0) target = $region9
    $region8: #{tpu_custom_call.1} parent=1 // pred_region
      %26 = vsyncadd [#allocation6], 0
      %s28 = sshll.u32 %s1, 4
      %s29 = int_to_ptr.hbm [resolvable:$true] %s28
      %s30 = sshll.u32 [#allocation5], 4
      %s31 = int_to_ptr.vmem [resolvable:$true] %s30
      %33 = dma.hbm_to_vmem [thread:$0]  %s29, 16, %s31, [#allocation6]
    $region9: #{tpu_custom_call.1} parent=1 // pred_fallthru
      _
    // Predicated region
    $region10: #{tpu_custom_call.1} parent=1 // pred_check
      _
    $region11: #{tpu_custom_call.1} parent=1 // pred_check_branch
      %35 = sbr.rel (0) target = $region13
    $region12: #{tpu_custom_call.1} parent=1 // pred_region
      _
    $region13: #{tpu_custom_call.1} parent=1 // pred_fallthru
      _
    // Predicated region
    $region14: #{tpu_custom_call.1} parent=1 // pred_check
      _
    $region15: #{tpu_custom_call.1} parent=1 // pred_check_branch
      %37 = sbr.rel (0) target = $region17
    $region16: #{tpu_custom_call.1} parent=1 // pred_region
      %39 = vsyncadd [#allocation6], 0
      %s40 = sshll.u32 %s3, 4
      %s41 = int_to_ptr.hbm [resolvable:$true] %s40
      %s42 = sshll.u32 [#allocation7], 4
      %s43 = int_to_ptr.vmem [resolvable:$true] %s42
      %48 = dma.hbm_to_vmem [thread:$0]  %s41, 2048, %s43, [#allocation6], 128, 128, 8
    $region17: #{tpu_custom_call.1} parent=1 // pred_fallthru
      _
    // Predicated region
    $region18: #{tpu_custom_call.1} parent=1 // pred_check
      _
    $region19: #{tpu_custom_call.1} parent=1 // pred_check_branch
      %50 = sbr.rel (0) target = $region21
    $region20: #{tpu_custom_call.1} parent=1 // pred_region
      %52 = dma.done [#allocation3], 128
    $region21: #{tpu_custom_call.1} parent=1 // pred_fallthru
      _
    // Predicated region
    $region22: #{tpu_custom_call.1} parent=1 // pred_check
      _
    $region23: #{tpu_custom_call.1} parent=1 // pred_check_branch
      %54 = sbr.rel (0) target = $region25
    $region24: #{tpu_custom_call.1} parent=1 // pred_region
      %56 = dma.done [#allocation6], 16
    $region25: #{tpu_custom_call.1} parent=1 // pred_fallthru
      _
    // Predicated region
    $region26: #{tpu_custom_call.1} parent=1 // pred_check
      _
    $region27: #{tpu_custom_call.1} parent=1 // pred_check_branch
      %58 = sbr.rel (0) target = $region29
    $region28: #{tpu_custom_call.1} parent=1 // pred_region
      %60 = dma.done [#allocation6], 2048
    $region29: #{tpu_custom_call.1} parent=1 // pred_fallthru
      _
    %v61 = vld [vmem:[#allocation2] sm:$0xff]
    %v62 = vld [vmem:[#allocation7] sm:$0xff]
    %v63 = vld [vmem:[#allocation7 + $0x8] sm:$0xff]
    %v64 = vld [vmem:[#allocation7 + $0x10] sm:$0xff]
    %v65 = vld [vmem:[#allocation7 + $0x18] sm:$0xff]
    %v66 = vld [vmem:[#allocation7 + $0x20] sm:$0xff]
    %v67 = vld [vmem:[#allocation7 + $0x28] sm:$0xff]
    %v68 = vld [vmem:[#allocation7 + $0x30] sm:$0xff]
    %v69 = vld [vmem:[#allocation7 + $0x38] sm:$0xff]
    %v70 = vld [vmem:[#allocation7 + $0x40] sm:$0xff]
    %v71 = vld [vmem:[#allocation7 + $0x48] sm:$0xff]
    %v72 = vld [vmem:[#allocation7 + $0x50] sm:$0xff]
    %v73 = vld [vmem:[#allocation7 + $0x58] sm:$0xff]
    %v74 = vld [vmem:[#allocation7 + $0x60] sm:$0xff]
    %v75 = vld [vmem:[#allocation7 + $0x68] sm:$0xff]
    %v76 = vld [vmem:[#allocation7 + $0x70] sm:$0xff]
    %v77 = vld [vmem:[#allocation7 + $0x78] sm:$0xff]
    %78 = vmatpush.msra.mxu0 %v77
    %79 = vmatpush.msra.mxu0 %v76
    %80 = vmatpush.msra.mxu0 %v75
    %81 = vmatpush.msra.mxu0 %v74
    %82 = vmatpush.msra.mxu0 %v73
    %83 = vmatpush.msra.mxu0 %v72
    %84 = vmatpush.msra.mxu0 %v71
    %85 = vmatpush.msra.mxu0 %v70
    %86 = vmatpush.msra.mxu0 %v69
    %87 = vmatpush.msra.mxu0 %v68
    %88 = vmatpush.msra.mxu0 %v67
    %89 = vmatpush.msra.mxu0 %v66
    %90 = vmatpush.msra.mxu0 %v65
    %91 = vmatpush.msra.mxu0 %v64
    %92 = vmatpush.msra.mxu0 %v63
    %93 = vmatpush.msra.mxu0 %v62
    %94 = vmatmul.f32.gmra.mxu0 %v61
    %v95 = vpop.f32.mrf.mxu0
    %v96 = vadd.f32 0.0, %v95
    %97 = vdwg.mxu0
    %v98 = vmul.f32 %v96, 0.03125
    %v99 = vsub.f32 %v61, %v98
    %v100 = vmul.f32 %v99, %v99
    %101 = vmatpush.msra.mxu0 %v77
    %102 = vmatpush.msra.mxu0 %v76
    %103 = vmatpush.msra.mxu0 %v75
    %104 = vmatpush.msra.mxu0 %v74
    %105 = vmatpush.msra.mxu0 %v73
    %106 = vmatpush.msra.mxu0 %v72
    %107 = vmatpush.msra.mxu0 %v71
    %108 = vmatpush.msra.mxu0 %v70
    %109 = vmatpush.msra.mxu0 %v69
    %110 = vmatpush.msra.mxu0 %v68
    %111 = vmatpush.msra.mxu0 %v67
    %112 = vmatpush.msra.mxu0 %v66
    %113 = vmatpush.msra.mxu0 %v65
    %114 = vmatpush.msra.mxu0 %v64
    %115 = vmatpush.msra.mxu0 %v63
    %116 = vmatpush.msra.mxu0 %v62
    %117 = vmatmul.f32.gmra.mxu0 %v100
    %v118 = vpop.f32.mrf.mxu0
    %v119 = vadd.f32 0.0, %v118
    %120 = vdwg.mxu0
    %v121 = vmul.f32 %v119, 0.03125
    %v122 = vadd.f32 %v121, 1e-05
    %v123 = vrsqrt.pop %v122
    %v124 = vmul.f32 %v123, %v122
    %v125 = vmul.f32 %v124, %v123
    %v126 = vmul.f32 0.5, %v125
    %v127 = vsub.f32 1.5, %v126
    %v128 = vmul.f32 %v123, %v127
    %vm129 = vweird.f32 %v122
    %vm130 = vweird.f32 %v123
    %vm131 = vmor %vm129, %vm130
    %v132 = vsel %vm131, %v123, %v128
    %v133 = vmul.f32 %v99, %v132
    %v134 = vld [vmem:[#allocation5] sm:$0x1]
    %v136 = vperm.slane %v134, 0
    %v138 = vmul.f32 %v133, %v136
    %v139 = vld [vmem:[%s2] sm:$0x1]
    %v141 = vperm.slane %v139, 0
    %v143 = vadd.f32 %v138, %v141
    %144 = vst [vmem:[#allocation8] sm:$0xff] %v143
    // Predicated region
    $region30: #{tpu_custom_call.1} parent=1 // pred_check
      _
    $region31: #{tpu_custom_call.1} parent=1 // pred_check_branch
      %146 = sbr.rel (0) target = $region33
    $region32: #{tpu_custom_call.1} parent=1 // pred_region
      %148 = vsyncadd [#allocation4], 0
      %s150 = sshll.u32 [#allocation8], 4
      %s151 = int_to_ptr.vmem [resolvable:$true] %s150
      %s152 = sshll.u32 %s4, 4
      %s153 = int_to_ptr.hbm [resolvable:$true] %s152
      %155 = dma.vmem_to_hbm [thread:$0]  %s151, 128, %s153, [#allocation4]
    $region33: #{tpu_custom_call.1} parent=1 // pred_fallthru
      _
    // Predicated region
    $region34: #{tpu_custom_call.1} parent=1 // pred_check
      _
    $region35: #{tpu_custom_call.1} parent=1 // pred_check_branch
      %157 = sbr.rel (0) target = $region37
    $region36: #{tpu_custom_call.1} parent=1 // pred_region
      %159 = dma.done [#allocation4], 128
    $region37: #{tpu_custom_call.1} parent=1 // pred_fallthru
      _
    %160 = vsyncpa [#allocation3], 1
    %161 = vsyncpa [#allocation6], 1
    %162 = vsyncpa [#allocation4], 1

</llo_original>
